<compile_context>
chip_gen: v5e
topology: v5e:2x2
jax: 0.10.0
libtpu: 0.0.40
codegen_flags: <defaults>
</compile_context>

<pallas_src>
import functools

import jax
import jax.numpy as jnp
from jax.experimental import pallas as pl
from jax.experimental.pallas import tpu as pltpu

IN_F = 784   # 28*28
H1 = 128
H2 = 64
OUT = 10
LANE = 128   # lane width used to pad the narrow hidden layer (numerically exact)


def _round_up(x, m):
    return (x + m - 1) // m * m


def fcnn_kernel(x_ref, w1_ref, b1_ref, w2_ref, b2_ref, w3_ref, b3_ref, o_ref):
    # fc1 + relu : cast the streamed f32 tile to bf16 in-kernel (no wrapper cast pass)
    x = x_ref[...].astype(jnp.bfloat16)
    h1 = jnp.dot(x, w1_ref[...], preferred_element_type=jnp.float32)
    h1 = jnp.maximum(h1 + b1_ref[...], 0.0)
    # fc2 + relu : fc2 lane-padded 64 -> 128 (zero cols -> 0, ReLU(0) = 0, exact)
    h2 = jnp.dot(h1.astype(jnp.bfloat16), w2_ref[...], preferred_element_type=jnp.float32)
    h2 = jnp.maximum(h2 + b2_ref[...], 0.0)
    # fc3 + relu : zero-padded rows of w3 kill the padded h2 lanes; output stays 10-wide
    h3 = jnp.dot(h2.astype(jnp.bfloat16), w3_ref[...], preferred_element_type=jnp.float32)
    o_ref[...] = jnp.maximum(h3 + b3_ref[...], 0.0).astype(o_ref.dtype)


def pack_params(params):
    """One-time weight preprocessing, hoisted out of the per-call path.

    Weights are stored (in, out) so the kernel computes x @ W + b. fc2 is lane-padded
    64 -> 128 and fc3's input dim is row-padded 64 -> 128 (exact: zero cols + ReLU(0)=0
    feed zero rows). Weights in bf16 for the MXU, biases in f32 for the epilogue.
    """
    w1, b1, w2, b2, w3, b3 = params
    w2p = jnp.zeros((H1, LANE), jnp.float32).at[:, :H2].set(w2)
    b2p = jnp.zeros((1, LANE), jnp.float32).at[:, :H2].set(b2)
    w3p = jnp.zeros((LANE, OUT), jnp.float32).at[:H2, :].set(w3)
    return (
        w1.astype(jnp.bfloat16),
        b1.astype(jnp.float32).reshape(1, H1),
        w2p.astype(jnp.bfloat16),
        b2p,
        w3p.astype(jnp.bfloat16),
        b3.astype(jnp.float32).reshape(1, OUT),
    )


@functools.partial(jax.jit, static_argnames=("tb",))
def fcnn_forward(x, packed_params, tb=2048):
    """x: (N, 1, 28, 28) (or anything with 784 trailing elems per row); returns (N, 10) f32."""
    w1b, b1f, w2b, b2f, w3b, b3f = packed_params
    x2d = x.reshape(-1, IN_F).astype(jnp.float32)   # no-op cast if already f32
    n = x2d.shape[0]

    # Tile: multiple of 8, at most tb, and small enough that the grid has >= 2 programs
    # whenever n >= 16 (v7x megacore sharding over the "parallel" batch axis).
    tile = min(tb, max(8, _round_up((n + 1) // 2, 8)))
    grid = (pl.cdiv(n, tile),)   # ragged last tile handled by Pallas block masking

    flops = 2 * n * (IN_F * H1 + H1 * LANE + LANE * OUT)
    bytes_accessed = (
        x2d.size * 4                                   # f32 activations in
        + (w1b.size + w2b.size + w3b.size) * 2         # bf16 weights (VMEM-resident)
        + (b1f.size + b2f.size + b3f.size) * 4         # f32 biases
        + n * OUT * 4                                  # narrow f32 output
    )

    out = pl.pallas_call(
        fcnn_kernel,
        out_shape=jax.ShapeDtypeStruct((n, OUT), jnp.float32),
        grid=grid,
        in_specs=[
            pl.BlockSpec((tile, IN_F), lambda i: (i, 0)),   # x: streamed f32 batch tiles
            pl.BlockSpec((IN_F, H1), lambda i: (0, 0)),     # w1 (bf16), VMEM-resident
            pl.BlockSpec((1, H1), lambda i: (0, 0)),        # b1 (f32)
            pl.BlockSpec((H1, LANE), lambda i: (0, 0)),     # w2 padded 64->128 (bf16)
            pl.BlockSpec((1, LANE), lambda i: (0, 0)),      # b2 padded (f32)
            pl.BlockSpec((LANE, OUT), lambda i: (0, 0)),    # w3 row-padded 64->128 (bf16)
            pl.BlockSpec((1, OUT), lambda i: (0, 0)),       # b3 (f32)
        ],
        out_specs=pl.BlockSpec((tile, OUT), lambda i: (i, 0)),
        compiler_params=pltpu.CompilerParams(
            dimension_semantics=("parallel",),          # megacore-shard batch tiles (v7x)
            vmem_limit_bytes=48 * 1024 * 1024,          # covers tb up to ~4096 f32 tiles; safe on v5e/v6e/v7x
        ),
        cost_estimate=pl.CostEstimate(
            flops=flops, bytes_accessed=bytes_accessed, transcendentals=0
        ),
    )(x2d, w1b, b1f, w2b, b2f, w3b, b3f)

    return out   # already (N, 10); no post-kernel slice pass


def init_params(key):
    """Deterministic init mimicking nn.Linear (uniform(-1/sqrt(in), 1/sqrt(in)))."""
    def linear(key, fan_in, fan_out):
        kw, kb = jax.random.split(key)
        bound = 1.0 / jnp.sqrt(fan_in)
        # stored (in, out) so the kernel computes x @ W + b
        w = jax.random.uniform(kw, (fan_in, fan_out), jnp.float32, -bound, bound)
        b = jax.random.uniform(kb, (1, fan_out), jnp.float32, -bound, bound)
        return w, b

    k1, k2, k3 = jax.random.split(key, 3)
    w1, b1 = linear(k1, IN_F, H1)
    w2, b2 = linear(k2, H1, H2)
    w3, b3 = linear(k3, H2, OUT)
    return (w1, b1, w2, b2, w3, b3)


def fcnn_reference(x, params):
    """Pure-JAX reference mirroring the kernel's bf16-dot / f32-epilogue numerics."""
    w1, b1, w2, b2, w3, b3 = params

    def lin_relu(h, w, b):
        y = jnp.dot(h.astype(jnp.bfloat16), w.astype(jnp.bfloat16),
                    preferred_element_type=jnp.float32)
        return jnp.maximum(y + b.astype(jnp.float32), 0.0)

    h = x.reshape(-1, IN_F).astype(jnp.float32)
    h = lin_relu(h, w1, b1)
    h = lin_relu(h, w2, b2)
    h = lin_relu(h, w3, b3)
    return h


if __name__ == "__main__":
    key = jax.random.PRNGKey(0)
    kx, kp = jax.random.split(key)

    params = init_params(kp)
    packed = pack_params(params)   # one-time preprocessing (hoisted out of forward)

    # small MNIST-shaped batch (NCHW), exact tile fit
    x = jax.random.normal(kx, (8, 1, 28, 28), jnp.float32)
    out = jax.block_until_ready(fcnn_forward(x, packed, tb=1024))
    ref = fcnn_reference(x, params)
    assert out.shape == (8, 10), out.shape
    assert jnp.allclose(out, ref, atol=1e-3, rtol=1e-3), "mismatch vs reference (N=8)"

    # ragged batch: exercises the partial last tile (no full-array pad/copy in the wrapper)
    x2 = jax.random.normal(kx, (300, 1, 28, 28), jnp.float32)
    out2 = jax.block_until_ready(fcnn_forward(x2, packed, tb=128))
    ref2 = fcnn_reference(x2, params)
    assert out2.shape == (300, 10), out2.shape
    assert jnp.allclose(out2, ref2, atol=1e-3, rtol=1e-3), "mismatch vs reference (N=300)"

    print("KERNEL_OK")
</pallas_src>

<mosaic_0001>
module attributes {stable_mosaic.version = 11 : i64} {
  func.func @fcnn_kernel(%arg0: i32, %arg1: memref<8x784xf32, #tpu.memory_space<vmem>>, %arg2: memref<784x128xbf16, #tpu.memory_space<vmem>>, %arg3: memref<1x128xf32, #tpu.memory_space<vmem>>, %arg4: memref<128x128xbf16, #tpu.memory_space<vmem>>, %arg5: memref<1x128xf32, #tpu.memory_space<vmem>>, %arg6: memref<128x10xbf16, #tpu.memory_space<vmem>>, %arg7: memref<1x10xf32, #tpu.memory_space<vmem>>, %arg8: memref<8x10xf32, #tpu.memory_space<vmem>>) attributes {dimension_semantics = [#tpu.dimension_semantics<parallel>], iteration_bounds = array<i64: 1>, scalar_prefetch = 0 : i64, scratch_operands = 0 : i64, tpu.core_type = #tpu.core_type<tc>, window_params = [{transform_indices = @transform_0, window_bounds = array<i64: 8, 784>}, {pipeline_mode = #tpu.pipeline_mode<synchronous>, transform_indices = @transform_1, window_bounds = array<i64: 784, 128>}, {pipeline_mode = #tpu.pipeline_mode<synchronous>, transform_indices = @transform_2, window_bounds = array<i64: 1, 128>}, {pipeline_mode = #tpu.pipeline_mode<synchronous>, transform_indices = @transform_3, window_bounds = array<i64: 128, 128>}, {pipeline_mode = #tpu.pipeline_mode<synchronous>, transform_indices = @transform_4, window_bounds = array<i64: 1, 128>}, {pipeline_mode = #tpu.pipeline_mode<synchronous>, transform_indices = @transform_5, window_bounds = array<i64: 128, 10>}, {pipeline_mode = #tpu.pipeline_mode<synchronous>, transform_indices = @transform_6, window_bounds = array<i64: 1, 10>}, {transform_indices = @transform_7, window_bounds = array<i64: 8, 10>}]} {
    %c0 = arith.constant 0 : index
    %c0_0 = arith.constant 0 : index
    %0 = vector.load %arg1[%c0, %c0_0] : memref<8x784xf32, #tpu.memory_space<vmem>>, vector<8x784xf32>
    %1 = arith.truncf %0 : vector<8x784xf32> to vector<8x784xbf16>
    %c0_1 = arith.constant 0 : index
    %c0_2 = arith.constant 0 : index
    %2 = vector.load %arg2[%c0_1, %c0_2] : memref<784x128xbf16, #tpu.memory_space<vmem>>, vector<784x128xbf16>
    %cst = arith.constant dense<0.000000e+00> : vector<8x128xf32>
    %3 = tpu.matmul %1, %2, %cst {dimension_numbers = #tpu.dot_dimension_numbers<[1], [0], [0], [1], [0, 0, 1, 1], [], []>} : vector<8x784xbf16>, vector<784x128xbf16>, vector<8x128xf32> -> vector<8x128xf32>
    %c0_3 = arith.constant 0 : index
    %c0_4 = arith.constant 0 : index
    %4 = vector.load %arg3[%c0_3, %c0_4] : memref<1x128xf32, #tpu.memory_space<vmem>>, vector<1x128xf32>
    %5 = vector.broadcast %4 : vector<1x128xf32> to vector<8x128xf32>
    %6 = arith.addf %3, %5 : vector<8x128xf32>
    %cst_5 = arith.constant 0.000000e+00 : f32
    %7 = vector.broadcast %cst_5 : f32 to vector<8x128xf32>
    %8 = arith.maximumf %6, %7 : vector<8x128xf32>
    %9 = arith.truncf %8 : vector<8x128xf32> to vector<8x128xbf16>
    %c0_6 = arith.constant 0 : index
    %c0_7 = arith.constant 0 : index
    %10 = vector.load %arg4[%c0_6, %c0_7] : memref<128x128xbf16, #tpu.memory_space<vmem>>, vector<128x128xbf16>
    %cst_8 = arith.constant dense<0.000000e+00> : vector<8x128xf32>
    %11 = tpu.matmul %9, %10, %cst_8 {dimension_numbers = #tpu.dot_dimension_numbers<[1], [0], [0], [1], [0, 0, 1, 1], [], []>} : vector<8x128xbf16>, vector<128x128xbf16>, vector<8x128xf32> -> vector<8x128xf32>
    %c0_9 = arith.constant 0 : index
    %c0_10 = arith.constant 0 : index
    %12 = vector.load %arg5[%c0_9, %c0_10] : memref<1x128xf32, #tpu.memory_space<vmem>>, vector<1x128xf32>
    %13 = vector.broadcast %12 : vector<1x128xf32> to vector<8x128xf32>
    %14 = arith.addf %11, %13 : vector<8x128xf32>
    %cst_11 = arith.constant 0.000000e+00 : f32
    %15 = vector.broadcast %cst_11 : f32 to vector<8x128xf32>
    %16 = arith.maximumf %14, %15 : vector<8x128xf32>
    %17 = arith.truncf %16 : vector<8x128xf32> to vector<8x128xbf16>
    %c0_12 = arith.constant 0 : index
    %c0_13 = arith.constant 0 : index
    %18 = vector.load %arg6[%c0_12, %c0_13] : memref<128x10xbf16, #tpu.memory_space<vmem>>, vector<128x10xbf16>
    %cst_14 = arith.constant dense<0.000000e+00> : vector<8x10xf32>
    %19 = tpu.matmul %17, %18, %cst_14 {dimension_numbers = #tpu.dot_dimension_numbers<[1], [0], [0], [1], [0, 0, 1, 1], [], []>} : vector<8x128xbf16>, vector<128x10xbf16>, vector<8x10xf32> -> vector<8x10xf32>
    %c0_15 = arith.constant 0 : index
    %c0_16 = arith.constant 0 : index
    %20 = vector.load %arg7[%c0_15, %c0_16] : memref<1x10xf32, #tpu.memory_space<vmem>>, vector<1x10xf32>
    %21 = vector.broadcast %20 : vector<1x10xf32> to vector<8x10xf32>
    %22 = arith.addf %19, %21 : vector<8x10xf32>
    %cst_17 = arith.constant 0.000000e+00 : f32
    %23 = vector.broadcast %cst_17 : f32 to vector<8x10xf32>
    %24 = arith.maximumf %22, %23 : vector<8x10xf32>
    %c0_18 = arith.constant 0 : index
    %c0_19 = arith.constant 0 : index
    %25 = vector.load %arg8[%c0_18, %c0_19] : memref<8x10xf32, #tpu.memory_space<vmem>>, vector<8x10xf32>
    tpu.vector_store %arg8[%c0_18, %c0_19], %24 {strides = array<i32>} : memref<8x10xf32, #tpu.memory_space<vmem>>, vector<8x10xf32>,
    return
  }
  func.func @transform_0(%arg0: i32) -> (i32, i32) {
    %c0_i32 = arith.constant 0 : i32
    %c0_i32_0 = arith.constant 0 : i32
    return %arg0, %c0_i32 : i32, i32
  }
  func.func @transform_1(%arg0: i32) -> (i32, i32) {
    %c0_i32 = arith.constant 0 : i32
    %c0_i32_0 = arith.constant 0 : i32
    %c0_i32_1 = arith.constant 0 : i32
    return %c0_i32, %c0_i32_0 : i32, i32
  }
  func.func @transform_2(%arg0: i32) -> (i32, i32) {
    %c0_i32 = arith.constant 0 : i32
    %c0_i32_0 = arith.constant 0 : i32
    %c0_i32_1 = arith.constant 0 : i32
    return %c0_i32, %c0_i32_0 : i32, i32
  }
  func.func @transform_3(%arg0: i32) -> (i32, i32) {
    %c0_i32 = arith.constant 0 : i32
    %c0_i32_0 = arith.constant 0 : i32
    %c0_i32_1 = arith.constant 0 : i32
    return %c0_i32, %c0_i32_0 : i32, i32
  }
  func.func @transform_4(%arg0: i32) -> (i32, i32) {
    %c0_i32 = arith.constant 0 : i32
    %c0_i32_0 = arith.constant 0 : i32
    %c0_i32_1 = arith.constant 0 : i32
    return %c0_i32, %c0_i32_0 : i32, i32
  }
  func.func @transform_5(%arg0: i32) -> (i32, i32) {
    %c0_i32 = arith.constant 0 : i32
    %c0_i32_0 = arith.constant 0 : i32
    %c0_i32_1 = arith.constant 0 : i32
    return %c0_i32, %c0_i32_0 : i32, i32
  }
  func.func @transform_6(%arg0: i32) -> (i32, i32) {
    %c0_i32 = arith.constant 0 : i32
    %c0_i32_0 = arith.constant 0 : i32
    %c0_i32_1 = arith.constant 0 : i32
    return %c0_i32, %c0_i32_0 : i32, i32
  }
  func.func @transform_7(%arg0: i32) -> (i32, i32) {
    %c0_i32 = arith.constant 0 : i32
    %c0_i32_0 = arith.constant 0 : i32
    return %arg0, %c0_i32 : i32, i32
  }
}

</mosaic_0001>

<llo_original>
// kernel: fcnn_forward.1
$region0: #{fcnn_forward.1}
  #allocation0 [shape = 'u32[]', space=smem, size = 0x4, offset = 0x4, fixed_abs, tag = 'smem constant byte address 0x4 - core index']
  #allocation1 [shape = 'u32[72,128]{1,0:T(1,128)}', space=vmem, size = 0x9000, scoped, tag = 'internal scratch']
  %s0 = inlined_call_operand.vmem [shape: f32[8,784], index: 0, kind: input, shape index: {}]
  %s1 = inlined_call_operand.vmem [shape: bf16[784,128], index: 1, kind: input, shape index: {}]
  %s2 = inlined_call_operand.vmem [shape: f32[1,128], index: 2, kind: input, shape index: {}]
  %s3 = inlined_call_operand.vmem [shape: bf16[128,128], index: 3, kind: input, shape index: {}]
  %s4 = inlined_call_operand.vmem [shape: f32[1,128], index: 4, kind: input, shape index: {}]
  %s5 = inlined_call_operand.vmem [shape: bf16[128,10], index: 5, kind: input, shape index: {}]
  %s6 = inlined_call_operand.vmem [shape: f32[1,10], index: 6, kind: input, shape index: {}]
  %s7 = inlined_call_operand.hbm [shape: f32[8,10], index: 7, kind: output, shape index: {}]
  %s8 = sld [smem:[#allocation0]]
  $region38: #{fcnn_forward.1} parent=0
    _
  %s10 = ssub.s32 1, %s8
  %s11 = scalar_select 0, %s10, %s8
  $region1: #{fcnn_forward.1} parent=0
    #allocation2 [shape = 'u8[4096]{0}', space=vmem, size = 0x1000, scoped, tag = 'output window, operand 0, single buffered']
    #allocation3 [shape = 's32[1]{0}', space=sflag, size = 0x4, scoped, tag = 'scoped memory for fcnn_forward.1']
    %12 = vsyncpa [#allocation3], 0
    // Predicated region
    $region2: #{fcnn_forward.1} parent=1 // pred_check
      _
    $region3: #{fcnn_forward.1} parent=1 // pred_check_branch
      %14 = sbr.rel (0) target = $region5
    $region4: #{fcnn_forward.1} parent=1 // pred_region
      _
    $region5: #{fcnn_forward.1} parent=1 // pred_fallthru
      _
    // Predicated region
    $region6: #{fcnn_forward.1} parent=1 // pred_check
      _
    $region7: #{fcnn_forward.1} parent=1 // pred_check_branch
      %16 = sbr.rel (0) target = $region9
    $region8: #{fcnn_forward.1} parent=1 // pred_region
      _
    $region9: #{fcnn_forward.1} parent=1 // pred_fallthru
      _
    // Predicated region
    $region10: #{fcnn_forward.1} parent=1 // pred_check
      _
    $region11: #{fcnn_forward.1} parent=1 // pred_check_branch
      %18 = sbr.rel (0) target = $region13
    $region12: #{fcnn_forward.1} parent=1 // pred_region
      _
    $region13: #{fcnn_forward.1} parent=1 // pred_fallthru
      _
    // Predicated region
    $region14: #{fcnn_forward.1} parent=1 // pred_check
      _
    $region15: #{fcnn_forward.1} parent=1 // pred_check_branch
      %20 = sbr.rel (0) target = $region17
    $region16: #{fcnn_forward.1} parent=1 // pred_region
      _
    $region17: #{fcnn_forward.1} parent=1 // pred_fallthru
      _
    // Predicated region
    $region18: #{fcnn_forward.1} parent=1 // pred_check
      _
    $region19: #{fcnn_forward.1} parent=1 // pred_check_branch
      %22 = sbr.rel (0) target = $region21
    $region20: #{fcnn_forward.1} parent=1 // pred_region
      _
    $region21: #{fcnn_forward.1} parent=1 // pred_fallthru
      _
    // Predicated region
    $region22: #{fcnn_forward.1} parent=1 // pred_check
      _
    $region23: #{fcnn_forward.1} parent=1 // pred_check_branch
      %24 = sbr.rel (0) target = $region25
    $region24: #{fcnn_forward.1} parent=1 // pred_region
      _
    $region25: #{fcnn_forward.1} parent=1 // pred_fallthru
      _
    // Predicated region
    $region26: #{fcnn_forward.1} parent=1 // pred_check
      _
    $region27: #{fcnn_forward.1} parent=1 // pred_check_branch
      %26 = sbr.rel (0) target = $region29
    $region28: #{fcnn_forward.1} parent=1 // pred_region
      _
    $region29: #{fcnn_forward.1} parent=1 // pred_fallthru
      _
    %v28 = vld [vmem:[%s0] sm:$0xff]
    %v29 = vld [vmem:[%s0 + $0x8] sm:$0xff]
    %v30 = vld [vmem:[%s0 + $0x10] sm:$0xff]
    %v31 = vld [vmem:[%s0 + $0x18] sm:$0xff]
    %v32 = vld [vmem:[%s0 + $0x20] sm:$0xff]
    %v33 = vld [vmem:[%s0 + $0x28] sm:$0xff]
    %v34 = vld [vmem:[%s0 + $0x30] sm:$0xff]
    %v35 = vpack.c.bf16 %v28, %v28
    %v36 = vpack.c.bf16 %v29, %v29
    %v37 = vpack.c.bf16 %v30, %v30
    %v38 = vpack.c.bf16 %v31, %v31
    %v39 = vpack.c.bf16 %v32, %v32
    %v40 = vpack.c.bf16 %v33, %v33
    %v41 = vpack.c.bf16 %v34, %v34
    %v42 = vld [vmem:[%s1] sm:$0xf]
    %v43 = vld [vmem:[%s1 + $0x4] sm:$0xf]
    %v44 = vld [vmem:[%s1 + $0x8] sm:$0xf]
    %v45 = vld [vmem:[%s1 + $0xc] sm:$0xf]
    %v46 = vld [vmem:[%s1 + $0x10] sm:$0xf]
    %v47 = vld [vmem:[%s1 + $0x14] sm:$0xf]
    %v48 = vld [vmem:[%s1 + $0x18] sm:$0xf]
    %v49 = vld [vmem:[%s1 + $0x1c] sm:$0xf]
    %v50 = vld [vmem:[%s1 + $0x20] sm:$0xf]
    %v51 = vld [vmem:[%s1 + $0x24] sm:$0xf]
    %v52 = vld [vmem:[%s1 + $0x28] sm:$0xf]
    %v53 = vld [vmem:[%s1 + $0x2c] sm:$0xf]
    %v54 = vld [vmem:[%s1 + $0x30] sm:$0xf]
    %v55 = vld [vmem:[%s1 + $0x34] sm:$0xf]
    %v56 = vld [vmem:[%s1 + $0x38] sm:$0xf]
    %v57 = vld [vmem:[%s1 + $0x3c] sm:$0xf]
    %v58 = vld [vmem:[%s1 + $0x40] sm:$0xf]
    %v59 = vld [vmem:[%s1 + $0x44] sm:$0xf]
    %v60 = vld [vmem:[%s1 + $0x48] sm:$0xf]
    %v61 = vld [vmem:[%s1 + $0x4c] sm:$0xf]
    %v62 = vld [vmem:[%s1 + $0x50] sm:$0xf]
    %v63 = vld [vmem:[%s1 + $0x54] sm:$0xf]
    %v64 = vld [vmem:[%s1 + $0x58] sm:$0xf]
    %v65 = vld [vmem:[%s1 + $0x5c] sm:$0xf]
    %v66 = vld [vmem:[%s1 + $0x60] sm:$0xf]
    %v67 = vld [vmem:[%s1 + $0x64] sm:$0xf]
    %v68 = vld [vmem:[%s1 + $0x68] sm:$0xf]
    %v69 = vld [vmem:[%s1 + $0x6c] sm:$0xf]
    %v70 = vld [vmem:[%s1 + $0x70] sm:$0xf]
    %v71 = vld [vmem:[%s1 + $0x74] sm:$0xf]
    %v72 = vld [vmem:[%s1 + $0x78] sm:$0xf]
    %v73 = vld [vmem:[%s1 + $0x7c] sm:$0xf]
    %v74 = vld [vmem:[%s1 + $0x80] sm:$0xf]
    %v75 = vld [vmem:[%s1 + $0x84] sm:$0xf]
    %v76 = vld [vmem:[%s1 + $0x88] sm:$0xf]
    %v77 = vld [vmem:[%s1 + $0x8c] sm:$0xf]
    %v78 = vld [vmem:[%s1 + $0x90] sm:$0xf]
    %v79 = vld [vmem:[%s1 + $0x94] sm:$0xf]
    %v80 = vld [vmem:[%s1 + $0x98] sm:$0xf]
    %v81 = vld [vmem:[%s1 + $0x9c] sm:$0xf]
    %v82 = vld [vmem:[%s1 + $0xa0] sm:$0xf]
    %v83 = vld [vmem:[%s1 + $0xa4] sm:$0xf]
    %v84 = vld [vmem:[%s1 + $0xa8] sm:$0xf]
    %v85 = vld [vmem:[%s1 + $0xac] sm:$0xf]
    %v86 = vld [vmem:[%s1 + $0xb0] sm:$0xf]
    %v87 = vld [vmem:[%s1 + $0xb4] sm:$0xf]
    %v88 = vld [vmem:[%s1 + $0xb8] sm:$0xf]
    %v89 = vld [vmem:[%s1 + $0xbc] sm:$0xf]
    %v90 = vld [vmem:[%s1 + $0xc0] sm:$0xf]
    %v91 = vld [vmem:[%s1 + $0xc4] sm:$0xf]
    %v92 = vld [vmem:[%s1 + $0xc8] sm:$0xf]
    %v93 = vld [vmem:[%s1 + $0xcc] sm:$0xf]
    %v94 = vld [vmem:[%s1 + $0xd0] sm:$0xf]
    %v95 = vld [vmem:[%s1 + $0xd4] sm:$0xf]
    %v96 = vld [vmem:[%s1 + $0xd8] sm:$0xf]
    %v97 = vld [vmem:[%s1 + $0xdc] sm:$0xf]
    %v98 = vld [vmem:[%s1 + $0xe0] sm:$0xf]
    %v99 = vld [vmem:[%s1 + $0xe4] sm:$0xf]
    %v100 = vld [vmem:[%s1 + $0xe8] sm:$0xf]
    %v101 = vld [vmem:[%s1 + $0xec] sm:$0xf]
    %v102 = vld [vmem:[%s1 + $0xf0] sm:$0xf]
    %v103 = vld [vmem:[%s1 + $0xf4] sm:$0xf]
    %v104 = vld [vmem:[%s1 + $0xf8] sm:$0xf]
    %v105 = vld [vmem:[%s1 + $0xfc] sm:$0xf]
    %v106 = vld [vmem:[%s1 + $0x100] sm:$0xf]
    %v107 = vld [vmem:[%s1 + $0x104] sm:$0xf]
    %v108 = vld [vmem:[%s1 + $0x108] sm:$0xf]
    %v109 = vld [vmem:[%s1 + $0x10c] sm:$0xf]
    %v110 = vld [vmem:[%s1 + $0x110] sm:$0xf]
    %v111 = vld [vmem:[%s1 + $0x114] sm:$0xf]
    %v112 = vld [vmem:[%s1 + $0x118] sm:$0xf]
    %v113 = vld [vmem:[%s1 + $0x11c] sm:$0xf]
    %v114 = vld [vmem:[%s1 + $0x120] sm:$0xf]
    %v115 = vld [vmem:[%s1 + $0x124] sm:$0xf]
    %v116 = vld [vmem:[%s1 + $0x128] sm:$0xf]
    %v117 = vld [vmem:[%s1 + $0x12c] sm:$0xf]
    %v118 = vld [vmem:[%s1 + $0x130] sm:$0xf]
    %v119 = vld [vmem:[%s1 + $0x134] sm:$0xf]
    %v120 = vld [vmem:[%s1 + $0x138] sm:$0xf]
    %v121 = vld [vmem:[%s1 + $0x13c] sm:$0xf]
    %v122 = vld [vmem:[%s1 + $0x140] sm:$0xf]
    %v123 = vld [vmem:[%s1 + $0x144] sm:$0xf]
    %v124 = vld [vmem:[%s1 + $0x148] sm:$0xf]
    %v125 = vld [vmem:[%s1 + $0x14c] sm:$0xf]
    %v126 = vld [vmem:[%s1 + $0x150] sm:$0xf]
    %v127 = vld [vmem:[%s1 + $0x154] sm:$0xf]
    %v128 = vld [vmem:[%s1 + $0x158] sm:$0xf]
    %v129 = vld [vmem:[%s1 + $0x15c] sm:$0xf]
    %v130 = vld [vmem:[%s1 + $0x160] sm:$0xf]
    %v131 = vld [vmem:[%s1 + $0x164] sm:$0xf]
    %v132 = vld [vmem:[%s1 + $0x168] sm:$0xf]
    %v133 = vld [vmem:[%s1 + $0x16c] sm:$0xf]
    %v134 = vld [vmem:[%s1 + $0x170] sm:$0xf]
    %v135 = vld [vmem:[%s1 + $0x174] sm:$0xf]
    %v136 = vld [vmem:[%s1 + $0x178] sm:$0xf]
    %v137 = vld [vmem:[%s1 + $0x17c] sm:$0xf]
    %v138 = vld [vmem:[%s1 + $0x180] sm:$0xf]
    %v139 = vld [vmem:[%s1 + $0x184] sm:$0xf]
    %v140 = vld [vmem:[%s2] sm:$0x1]
    %v142 = vperm.slane %v140, 0
    %v242 = vunpack.c.l.b16 %v42
    %v243 = vunpack.c.l.b16 %v43
    %v244 = vunpack.c.l.b16 %v44
    %v245 = vunpack.c.l.b16 %v45
    %v246 = vunpack.c.l.b16 %v46
    %v247 = vunpack.c.l.b16 %v47
    %v248 = vunpack.c.l.b16 %v48
    %v249 = vunpack.c.l.b16 %v49
    %v250 = vunpack.c.l.b16 %v50
    %v251 = vunpack.c.l.b16 %v51
    %v252 = vunpack.c.l.b16 %v52
    %v253 = vunpack.c.l.b16 %v53
    %v254 = vunpack.c.l.b16 %v54
    %v255 = vunpack.c.l.b16 %v55
    %v256 = vunpack.c.l.b16 %v56
    %v257 = vunpack.c.l.b16 %v57
    %v258 = vunpack.c.l.b16 %v58
    %v259 = vunpack.c.l.b16 %v59
    %v260 = vunpack.c.l.b16 %v60
    %v261 = vunpack.c.l.b16 %v61
    %v262 = vunpack.c.l.b16 %v62
    %v263 = vunpack.c.l.b16 %v63
    %v264 = vunpack.c.l.b16 %v64
    %v265 = vunpack.c.l.b16 %v65
    %v266 = vunpack.c.l.b16 %v66
    %v267 = vunpack.c.l.b16 %v67
    %v268 = vunpack.c.l.b16 %v68
    %v269 = vunpack.c.l.b16 %v69
    %v270 = vunpack.c.l.b16 %v70
    %v271 = vunpack.c.l.b16 %v71
    %v272 = vunpack.c.l.b16 %v72
    %v273 = vunpack.c.l.b16 %v73
    %v274 = vunpack.c.l.b16 %v74
    %v275 = vunpack.c.l.b16 %v75
    %v276 = vunpack.c.l.b16 %v76
    %v277 = vunpack.c.l.b16 %v77
    %v278 = vunpack.c.l.b16 %v78
    %v279 = vunpack.c.l.b16 %v79
    %v280 = vunpack.c.l.b16 %v80
    %v281 = vunpack.c.l.b16 %v81
    %v282 = vunpack.c.l.b16 %v82
    %v283 = vunpack.c.l.b16 %v83
    %v284 = vunpack.c.l.b16 %v84
    %v285 = vunpack.c.l.b16 %v85
    %v286 = vunpack.c.l.b16 %v86
    %v287 = vunpack.c.l.b16 %v87
    %v288 = vunpack.c.l.b16 %v88
    %v289 = vunpack.c.l.b16 %v89
    %v290 = vunpack.c.l.b16 %v90
    %v291 = vunpack.c.l.b16 %v91
    %v292 = vunpack.c.l.b16 %v92
    %v293 = vunpack.c.l.b16 %v93
    %v294 = vunpack.c.l.b16 %v94
    %v295 = vunpack.c.l.b16 %v95
    %v296 = vunpack.c.l.b16 %v96
    %v297 = vunpack.c.l.b16 %v97
    %v298 = vunpack.c.l.b16 %v98
    %v299 = vunpack.c.l.b16 %v99
    %v300 = vunpack.c.l.b16 %v100
    %v301 = vunpack.c.l.b16 %v101
    %v302 = vunpack.c.l.b16 %v102
    %v303 = vunpack.c.l.b16 %v103
    %v304 = vunpack.c.l.b16 %v104
    %v305 = vunpack.c.l.b16 %v105
    %v306 = vunpack.c.l.b16 %v106
    %v307 = vunpack.c.l.b16 %v107
    %v308 = vunpack.c.l.b16 %v108
    %v309 = vunpack.c.l.b16 %v109
    %v310 = vunpack.c.l.b16 %v110
    %v311 = vunpack.c.l.b16 %v111
    %v312 = vunpack.c.l.b16 %v112
    %v313 = vunpack.c.l.b16 %v113
    %v314 = vunpack.c.l.b16 %v114
    %v315 = vunpack.c.l.b16 %v115
    %v316 = vunpack.c.l.b16 %v116
    %v317 = vunpack.c.l.b16 %v117
    %v318 = vunpack.c.l.b16 %v118
    %v319 = vunpack.c.l.b16 %v119
    %v320 = vunpack.c.l.b16 %v120
    %v321 = vunpack.c.l.b16 %v121
    %v322 = vunpack.c.l.b16 %v122
    %v323 = vunpack.c.l.b16 %v123
    %v324 = vunpack.c.l.b16 %v124
    %v325 = vunpack.c.l.b16 %v125
    %v326 = vunpack.c.l.b16 %v126
    %v327 = vunpack.c.l.b16 %v127
    %v328 = vunpack.c.l.b16 %v128
    %v329 = vunpack.c.l.b16 %v129
    %v330 = vunpack.c.l.b16 %v130
    %v331 = vunpack.c.l.b16 %v131
    %v332 = vunpack.c.l.b16 %v132
    %v333 = vunpack.c.l.b16 %v133
    %v334 = vunpack.c.l.b16 %v134
    %v335 = vunpack.c.l.b16 %v135
    %v336 = vunpack.c.l.b16 %v136
    %v337 = vunpack.c.l.b16 %v137
    %v338 = vunpack.c.l.b16 %v138
    %v339 = vunpack.c.l.b16 %v139
    %v340 = vpack.c.b16 %v243, %v242
    %v341 = vpack.c.b16 %v245, %v244
    %v342 = vpack.c.b16 %v247, %v246
    %v343 = vpack.c.b16 %v249, %v248
    %v344 = vpack.c.b16 %v251, %v250
    %v345 = vpack.c.b16 %v253, %v252
    %v346 = vpack.c.b16 %v255, %v254
    %v347 = vpack.c.b16 %v257, %v256
    %v348 = vpack.c.b16 %v259, %v258
    %v349 = vpack.c.b16 %v261, %v260
    %v350 = vpack.c.b16 %v263, %v262
    %v351 = vpack.c.b16 %v265, %v264
    %v352 = vpack.c.b16 %v267, %v266
    %v353 = vpack.c.b16 %v269, %v268
    %v354 = vpack.c.b16 %v271, %v270
    %v355 = vpack.c.b16 %v273, %v272
    %v356 = vpack.c.b16 %v275, %v274
    %v357 = vpack.c.b16 %v277, %v276
    %v358 = vpack.c.b16 %v279, %v278
    %v359 = vpack.c.b16 %v281, %v280
    %v360 = vpack.c.b16 %v283, %v282
    %v361 = vpack.c.b16 %v285, %v284
    %v362 = vpack.c.b16 %v287, %v286
    %v363 = vpack.c.b16 %v289, %v288
    %v364 = vpack.c.b16 %v291, %v290
    %v365 = vpack.c.b16 %v293, %v292
    %v366 = vpack.c.b16 %v295, %v294
    %v367 = vpack.c.b16 %v297, %v296
    %v368 = vpack.c.b16 %v299, %v298
    %v369 = vpack.c.b16 %v301, %v300
    %v370 = vpack.c.b16 %v303, %v302
    %v371 = vpack.c.b16 %v305, %v304
    %v372 = vpack.c.b16 %v307, %v306
    %v373 = vpack.c.b16 %v309, %v308
    %v374 = vpack.c.b16 %v311, %v310
    %v375 = vpack.c.b16 %v313, %v312
    %v376 = vpack.c.b16 %v315, %v314
    %v377 = vpack.c.b16 %v317, %v316
    %v378 = vpack.c.b16 %v319, %v318
    %v379 = vpack.c.b16 %v321, %v320
    %v380 = vpack.c.b16 %v323, %v322
    %v381 = vpack.c.b16 %v325, %v324
    %v382 = vpack.c.b16 %v327, %v326
    %v383 = vpack.c.b16 %v329, %v328
    %v384 = vpack.c.b16 %v331, %v330
    %v385 = vpack.c.b16 %v333, %v332
    %v386 = vpack.c.b16 %v335, %v334
    %v387 = vpack.c.b16 %v337, %v336
    %v388 = vpack.c.b16 %v339, %v338
    %vm438 = vcmask 130048
    %v440 = vsel %vm438, %v41, 0
    %442 = vmatpush.bf16.msra.mxu0 %v347
    %443 = vmatpush.bf16.msra.mxu0 %v346
    %444 = vmatpush.bf16.msra.mxu0 %v345
    %445 = vmatpush.bf16.msra.mxu0 %v344
    %446 = vmatpush.bf16.msra.mxu0 %v343
    %447 = vmatpush.bf16.msra.mxu0 %v342
    %448 = vmatpush.bf16.msra.mxu0 %v341
    %449 = vmatpush.bf16.msra.mxu0 %v340
    %450 = vmatmul.bf16.gmra.mxu0 %v35
    %v451 = vpop.f32.mrf.mxu0
    %v452 = vadd.f32 %v142, %v451
    %v453 = vpop.f32.mrf.mxu0
    %454 = vdwg.mxu0
    %455 = vmatpush.bf16.msra.mxu0 %v355
    %456 = vmatpush.bf16.msra.mxu0 %v354
    %457 = vmatpush.bf16.msra.mxu0 %v353
    %458 = vmatpush.bf16.msra.mxu0 %v352
    %459 = vmatpush.bf16.msra.mxu0 %v351
    %460 = vmatpush.bf16.msra.mxu0 %v350
    %461 = vmatpush.bf16.msra.mxu0 %v349
    %462 = vmatpush.bf16.msra.mxu0 %v348
    %463 = vmatmul.bf16.gmra.mxu0 %v36
    %v464 = vpop.f32.mrf.mxu0
    %v465 = vadd.f32 %v452, %v464
    %v466 = vpop.f32.mrf.mxu0
    %467 = vdwg.mxu0
    %468 = vmatpush.bf16.msra.mxu0 %v363
    %469 = vmatpush.bf16.msra.mxu0 %v362
    %470 = vmatpush.bf16.msra.mxu0 %v361
    %471 = vmatpush.bf16.msra.mxu0 %v360
    %472 = vmatpush.bf16.msra.mxu0 %v359
    %473 = vmatpush.bf16.msra.mxu0 %v358
    %474 = vmatpush.bf16.msra.mxu0 %v357
    %475 = vmatpush.bf16.msra.mxu0 %v356
    %476 = vmatmul.bf16.gmra.mxu0 %v37
    %v477 = vpop.f32.mrf.mxu0
    %v478 = vadd.f32 %v465, %v477
    %v479 = vpop.f32.mrf.mxu0
    %480 = vdwg.mxu0
    %481 = vmatpush.bf16.msra.mxu0 %v371
    %482 = vmatpush.bf16.msra.mxu0 %v370
    %483 = vmatpush.bf16.msra.mxu0 %v369
    %484 = vmatpush.bf16.msra.mxu0 %v368
    %485 = vmatpush.bf16.msra.mxu0 %v367
    %486 = vmatpush.bf16.msra.mxu0 %v366
    %487 = vmatpush.bf16.msra.mxu0 %v365
    %488 = vmatpush.bf16.msra.mxu0 %v364
    %489 = vmatmul.bf16.gmra.mxu0 %v38
    %v490 = vpop.f32.mrf.mxu0
    %v491 = vadd.f32 %v478, %v490
    %v492 = vpop.f32.mrf.mxu0
    %493 = vdwg.mxu0
    %494 = vmatpush.bf16.msra.mxu0 %v379
    %495 = vmatpush.bf16.msra.mxu0 %v378
    %496 = vmatpush.bf16.msra.mxu0 %v377
    %497 = vmatpush.bf16.msra.mxu0 %v376
    %498 = vmatpush.bf16.msra.mxu0 %v375
    %499 = vmatpush.bf16.msra.mxu0 %v374
    %500 = vmatpush.bf16.msra.mxu0 %v373
    %501 = vmatpush.bf16.msra.mxu0 %v372
    %502 = vmatmul.bf16.gmra.mxu0 %v39
    %v503 = vpop.f32.mrf.mxu0
    %v504 = vadd.f32 %v491, %v503
    %v505 = vpop.f32.mrf.mxu0
    %506 = vdwg.mxu0
    %507 = vmatpush.bf16.msra.mxu0 %v387
    %508 = vmatpush.bf16.msra.mxu0 %v386
    %509 = vmatpush.bf16.msra.mxu0 %v385
    %510 = vmatpush.bf16.msra.mxu0 %v384
    %511 = vmatpush.bf16.msra.mxu0 %v383
    %512 = vmatpush.bf16.msra.mxu0 %v382
    %513 = vmatpush.bf16.msra.mxu0 %v381
    %514 = vmatpush.bf16.msra.mxu0 %v380
    %515 = vmatmul.bf16.gmra.mxu0 %v40
    %v516 = vpop.f32.mrf.mxu0
    %v517 = vadd.f32 %v504, %v516
    %v518 = vpop.f32.mrf.mxu0
    %519 = vdwg.mxu0
    %520 = vmatpush.bf16.msra.mxu0 0
    %521 = vmatpush.bf16.msra.mxu0 0
    %522 = vmatpush.bf16.msra.mxu0 0
    %523 = vmatpush.bf16.msra.mxu0 0
    %524 = vmatpush.bf16.msra.mxu0 0
    %525 = vmatpush.bf16.msra.mxu0 0
    %526 = vmatpush.bf16.msra.mxu0 0
    %527 = vmatpush.bf16.msra.mxu0 %v388
    %528 = vmatmul.bf16.gmra.mxu0 %v440
    %v529 = vpop.f32.mrf.mxu0
    %v530 = vadd.f32 %v517, %v529
    %v531 = vpop.f32.mrf.mxu0
    %532 = vdwg.mxu0
    %v533 = vmax.f32 %v530, 0.0
    %v534 = vpack.c.bf16 %v533, %v533
    %v535 = vld [vmem:[%s3] sm:$0xf]
    %v536 = vld [vmem:[%s3 + $0x4] sm:$0xf]
    %v537 = vld [vmem:[%s3 + $0x8] sm:$0xf]
    %v538 = vld [vmem:[%s3 + $0xc] sm:$0xf]
    %v539 = vld [vmem:[%s3 + $0x10] sm:$0xf]
    %v540 = vld [vmem:[%s3 + $0x14] sm:$0xf]
    %v541 = vld [vmem:[%s3 + $0x18] sm:$0xf]
    %v542 = vld [vmem:[%s3 + $0x1c] sm:$0xf]
    %v543 = vld [vmem:[%s3 + $0x20] sm:$0xf]
    %v544 = vld [vmem:[%s3 + $0x24] sm:$0xf]
    %v545 = vld [vmem:[%s3 + $0x28] sm:$0xf]
    %v546 = vld [vmem:[%s3 + $0x2c] sm:$0xf]
    %v547 = vld [vmem:[%s3 + $0x30] sm:$0xf]
    %v548 = vld [vmem:[%s3 + $0x34] sm:$0xf]
    %v549 = vld [vmem:[%s3 + $0x38] sm:$0xf]
    %v550 = vld [vmem:[%s3 + $0x3c] sm:$0xf]
    %v551 = vld [vmem:[%s4] sm:$0x1]
    %v553 = vperm.slane %v551, 0
    %v571 = vunpack.c.l.b16 %v535
    %v572 = vunpack.c.l.b16 %v536
    %v573 = vunpack.c.l.b16 %v537
    %v574 = vunpack.c.l.b16 %v538
    %v575 = vunpack.c.l.b16 %v539
    %v576 = vunpack.c.l.b16 %v540
    %v577 = vunpack.c.l.b16 %v541
    %v578 = vunpack.c.l.b16 %v542
    %v579 = vunpack.c.l.b16 %v543
    %v580 = vunpack.c.l.b16 %v544
    %v581 = vunpack.c.l.b16 %v545
    %v582 = vunpack.c.l.b16 %v546
    %v583 = vunpack.c.l.b16 %v547
    %v584 = vunpack.c.l.b16 %v548
    %v585 = vunpack.c.l.b16 %v549
    %v586 = vunpack.c.l.b16 %v550
    %v587 = vpack.c.b16 %v572, %v571
    %v588 = vpack.c.b16 %v574, %v573
    %v589 = vpack.c.b16 %v576, %v575
    %v590 = vpack.c.b16 %v578, %v577
    %v591 = vpack.c.b16 %v580, %v579
    %v592 = vpack.c.b16 %v582, %v581
    %v593 = vpack.c.b16 %v584, %v583
    %v594 = vpack.c.b16 %v586, %v585
    %603 = vmatpush.bf16.msra.mxu0 %v594
    %604 = vmatpush.bf16.msra.mxu0 %v593
    %605 = vmatpush.bf16.msra.mxu0 %v592
    %606 = vmatpush.bf16.msra.mxu0 %v591
    %607 = vmatpush.bf16.msra.mxu0 %v590
    %608 = vmatpush.bf16.msra.mxu0 %v589
    %609 = vmatpush.bf16.msra.mxu0 %v588
    %610 = vmatpush.bf16.msra.mxu0 %v587
    %611 = vmatmul.bf16.gmra.mxu0 %v534
    %v612 = vpop.f32.mrf.mxu0
    %v613 = vadd.f32 %v553, %v612
    %v614 = vpop.f32.mrf.mxu0
    %615 = vdwg.mxu0
    %v616 = vmax.f32 %v613, 0.0
    %v617 = vpack.c.bf16 %v616, %v616
    %v618 = vld [vmem:[%s5] sm:$0xf]
    %v619 = vld [vmem:[%s5 + $0x4] sm:$0xf]
    %v620 = vld [vmem:[%s5 + $0x8] sm:$0xf]
    %v621 = vld [vmem:[%s5 + $0xc] sm:$0xf]
    %v622 = vld [vmem:[%s5 + $0x10] sm:$0xf]
    %v623 = vld [vmem:[%s5 + $0x14] sm:$0xf]
    %v624 = vld [vmem:[%s5 + $0x18] sm:$0xf]
    %v625 = vld [vmem:[%s5 + $0x1c] sm:$0xf]
    %v626 = vld [vmem:[%s5 + $0x20] sm:$0xf]
    %v627 = vld [vmem:[%s5 + $0x24] sm:$0xf]
    %v628 = vld [vmem:[%s5 + $0x28] sm:$0xf]
    %v629 = vld [vmem:[%s5 + $0x2c] sm:$0xf]
    %v630 = vld [vmem:[%s5 + $0x30] sm:$0xf]
    %v631 = vld [vmem:[%s5 + $0x34] sm:$0xf]
    %v632 = vld [vmem:[%s5 + $0x38] sm:$0xf]
    %v633 = vld [vmem:[%s5 + $0x3c] sm:$0xf]
    %v634 = vld [vmem:[%s6] sm:$0x1]
    %v636 = vperm.slane %v634, 0
    %v654 = vunpack.c.l.b16 %v618
    %v655 = vunpack.c.l.b16 %v619
    %v656 = vunpack.c.l.b16 %v620
    %v657 = vunpack.c.l.b16 %v621
    %v658 = vunpack.c.l.b16 %v622
    %v659 = vunpack.c.l.b16 %v623
    %v660 = vunpack.c.l.b16 %v624
    %v661 = vunpack.c.l.b16 %v625
    %v662 = vunpack.c.l.b16 %v626
    %v663 = vunpack.c.l.b16 %v627
    %v664 = vunpack.c.l.b16 %v628
    %v665 = vunpack.c.l.b16 %v629
    %v666 = vunpack.c.l.b16 %v630
    %v667 = vunpack.c.l.b16 %v631
    %v668 = vunpack.c.l.b16 %v632
    %v669 = vunpack.c.l.b16 %v633
    %v670 = vpack.c.b16 %v655, %v654
    %v671 = vpack.c.b16 %v657, %v656
    %v672 = vpack.c.b16 %v659, %v658
    %v673 = vpack.c.b16 %v661, %v660
    %v674 = vpack.c.b16 %v663, %v662
    %v675 = vpack.c.b16 %v665, %v664
    %v676 = vpack.c.b16 %v667, %v666
    %v677 = vpack.c.b16 %v669, %v668
    %686 = vmatpush.bf16.msra.mxu0 %v677
    %687 = vmatpush.bf16.msra.mxu0 %v676
    %688 = vmatpush.bf16.msra.mxu0 %v675
    %689 = vmatpush.bf16.msra.mxu0 %v674
    %690 = vmatpush.bf16.msra.mxu0 %v673
    %691 = vmatpush.bf16.msra.mxu0 %v672
    %692 = vmatpush.bf16.msra.mxu0 %v671
    %693 = vmatpush.bf16.msra.mxu0 %v670
    %694 = vmatmul.bf16.gmra.mxu0 %v617
    %v695 = vpop.f32.mrf.mxu0
    %v696 = vadd.f32 %v636, %v695
    %v697 = vpop.f32.mrf.mxu0
    %698 = vdwg.mxu0
    %v699 = vmax.f32 %v696, 0.0
    %vm700 = vcmask 80896
    %701 = vst.msk [vmem:[#allocation2] sm:$0xff] %vm700, %v699
    // Predicated region
    $region30: #{fcnn_forward.1} parent=1 // pred_check
      _
    $region31: #{fcnn_forward.1} parent=1 // pred_check_branch
      %703 = sbr.rel (0) target = $region33
    $region32: #{fcnn_forward.1} parent=1 // pred_region
      %705 = vsyncadd [#allocation3], 0
      %s707 = sshll.u32 [#allocation2], 4
      %s708 = int_to_ptr.vmem [resolvable:$true] %s707
      %s709 = sshll.u32 %s7, 4
      %s710 = int_to_ptr.hbm [resolvable:$true] %s709
      %712 = dma.vmem_to_hbm [thread:$0]  %s708, 128, %s710, [#allocation3]
    $region33: #{fcnn_forward.1} parent=1 // pred_fallthru
      _
    // Predicated region
    $region34: #{fcnn_forward.1} parent=1 // pred_check
      _
    $region35: #{fcnn_forward.1} parent=1 // pred_check_branch
      %714 = sbr.rel (0) target = $region37
    $region36: #{fcnn_forward.1} parent=1 // pred_region
      %716 = dma.done [#allocation3], 128
    $region37: #{fcnn_forward.1} parent=1 // pred_fallthru
      _
    %717 = vsyncpa [#allocation3], 1

</llo_original>
